<compile_context>
chip_gen: v7x
topology: tpu7x:2x2x1
jax: 0.10.0
libtpu: 0.0.40
codegen_flags: <defaults>
</compile_context>

<pallas_src>
import functools

import jax
import jax.numpy as jnp
import numpy as np
from jax.experimental import pallas as pl
from jax.experimental.pallas import tpu as pltpu

_LANE = 128
_MAX_LANE_TILE = 16384        # lane-tile cap so big B*K stays VMEM-friendly


def _per_proj_loss_kernel(cam_ref, pred_ref, gt_ref, *rest, n_views,
                          loss_type, use_target_weight):
    """One grid step == one lane tile; all V camera views vectorized along
    the sublane axis.

    cam_ref  : VMEM (V, 21)   packed per-view camera scalars
               [R(9), T(3), f(2), c(2), k(3), p(2)]
    pred_ref : VMEM (3, TN)   flattened pred keypoints (x;y;z rows)
    gt_ref   : VMEM (3, TN)
    w_ref    : VMEM (V, TN)   (only present when use_target_weight)
    out_ref  : VMEM (2V, TN)  rows 0..V-1 = u-loss, rows V..2V-1 = v-loss
    """
    if use_target_weight:
        w_ref, out_ref = rest
    else:
        (out_ref,) = rest

    V = n_views
    tn = pred_ref.shape[1]
    cam = cam_ref[...]                       # (V, 21)

    def col(j):
        return cam[:, j:j + 1]               # (V, 1), lane-broadcastable

    r00, r01, r02 = col(0), col(1), col(2)
    r10, r11, r12 = col(3), col(4), col(5)
    r20, r21, r22 = col(6), col(7), col(8)
    t0, t1, t2 = col(9), col(10), col(11)
    fx, fy = col(12), col(13)
    cx, cy = col(14), col(15)
    k0, k1, k2 = col(16), col(17), col(18)
    p0, p1 = col(19), col(20)

    def project(x_ref):
        x = x_ref[...]                                      # (3, TN)
        # Hoisted sublane broadcasts (JAX does not CSE broadcast_in_dim).
        x0 = jnp.broadcast_to(x[0:1, :], (V, tn))
        x1 = jnp.broadcast_to(x[1:2, :], (V, tn))
        x2 = jnp.broadcast_to(x[2:3, :], (V, tn))
        xr0 = x0 - t0
        xr1 = x1 - t1
        xr2 = x2 - t2
        # xcam = R @ (x - T); 3x3 contraction stays on the VPU (far below
        # MXU tile size), unrolled as (V,1)-column * (V,TN)-vector FMAs.
        xc0 = r00 * xr0 + r01 * xr1 + r02 * xr2
        xc1 = r10 * xr0 + r11 * xr1 + r12 * xr2
        xc2 = r20 * xr0 + r21 * xr1 + r22 * xr2
        inv = pl.reciprocal(xc2 + 1e-5, approx=False)       # shared, exact
        y0 = xc0 * inv
        y1 = xc1 * inv
        r2 = y0 * y0 + y1 * y1
        radial = 1.0 + r2 * (k0 + r2 * (k1 + r2 * k2))      # Horner form
        tan = p0 * y1 + p1 * y0
        corr = radial + 2.0 * tan
        u = fx * (y0 * corr + p1 * r2) + cx
        v = fy * (y1 * corr + p0 * r2) + cy
        return u, v                                          # each (V, TN)

    pu, pv = project(pred_ref)
    gu, gv = project(gt_ref)

    if use_target_weight:
        w = w_ref[...]                                       # (V, TN)
        pu = pu * w
        pv = pv * w
        gu = gu * w
        gv = gv * w

    du = pu - gu
    dv = pv - gv
    if loss_type == 'l1':
        du = jnp.abs(du)
        dv = jnp.abs(dv)
    elif loss_type == 'l2':
        du = du * du
        dv = dv * dv
    else:
        raise NotImplementedError(loss_type)

    out_ref[0:V, :] = du
    out_ref[V:2 * V, :] = dv


def per_projection_loss(pred, target, cameras, target_weight=None,
                        use_target_weight=False, loss_type='l1',
                        reduction='none'):
    """JAX/Pallas equivalent of PerProjectionL1Loss.forward.

    pred, target : (B, K, 3) float32 3D keypoints
    cameras      : dict with 'R' (V,3,3), 'T' (V,3), 'f' (V,2), 'c' (V,2),
                   'k' (V,3), 'p' (V,2)
    target_weight: (V, B, K, 1) or None
    Returns (V*B, K, 2) elementwise loss (reduction='none'),
    or a scalar for 'mean' / 'sum' when use_target_weight=True.
    """
    if reduction is None:
        reduction = 'none'
    B, K, _ = pred.shape
    V = cameras['R'].shape[0]
    N = B * K

    # Lane-dense padding of the keypoint axis (multiple of 128; tiled when
    # very large so the per-step VMEM footprint stays small on v7x).
    n_pad = pl.cdiv(max(N, 1), _LANE) * _LANE
    if n_pad > _MAX_LANE_TILE:
        tn = _MAX_LANE_TILE
        n_pad = pl.cdiv(n_pad, tn) * tn
    else:
        tn = n_pad
    n_tiles = n_pad // tn

    def flatten_pts(x):
        x = x.reshape(N, 3).T.astype(jnp.float32)            # (3, N)
        return jnp.pad(x, ((0, 0), (0, n_pad - N)))           # (3, n_pad)

    pred_t = flatten_pts(pred)
    gt_t = flatten_pts(target)

    cam_packed = jnp.concatenate([
        cameras['R'].reshape(V, 9),
        cameras['T'].reshape(V, 3),
        cameras['f'].reshape(V, 2),
        cameras['c'].reshape(V, 2),
        cameras['k'].reshape(V, 3),
        cameras['p'].reshape(V, 2),
    ], axis=1).astype(jnp.float32)                            # (V, 21)

    kernel = functools.partial(_per_proj_loss_kernel, n_views=V,
                               loss_type=loss_type,
                               use_target_weight=use_target_weight)

    in_specs = [
        pl.BlockSpec((V, 21), lambda i: (0, 0)),              # cameras
        pl.BlockSpec((3, tn), lambda i: (0, i)),              # pred
        pl.BlockSpec((3, tn), lambda i: (0, i)),              # target
    ]
    args = [cam_packed, pred_t, gt_t]
    if use_target_weight:
        w = target_weight.reshape(V, N).astype(jnp.float32)
        w = jnp.pad(w, ((0, 0), (0, n_pad - N)))              # (V, n_pad)
        in_specs.append(pl.BlockSpec((V, tn), lambda i: (0, i)))
        args.append(w)

    out = pl.pallas_call(
        kernel,
        out_shape=jax.ShapeDtypeStruct((2 * V, n_pad), jnp.float32),
        grid=(n_tiles,),
        in_specs=in_specs,
        out_specs=pl.BlockSpec((2 * V, tn), lambda i: (0, i)),
        compiler_params=pltpu.CompilerParams(
            dimension_semantics=("parallel",)),
    )(*args)

    valid = out[:, :N]                                        # (2V, N)

    # PyTorch module only honours reduction when use_target_weight=True;
    # the reductions are permutation-invariant, so reduce the slab directly.
    if use_target_weight and reduction == 'mean':
        return jnp.mean(valid)
    if use_target_weight and reduction == 'sum':
        return jnp.sum(valid)

    # (2V, N) -> (V*B, K, 2) matching the torch layout [..., (u, v)].
    u = valid[:V].reshape(V, B, K)
    v = valid[V:].reshape(V, B, K)
    return jnp.stack([u, v], axis=-1).reshape(V * B, K, 2)


def _reference_loss(pred, target, cameras, target_weight, use_target_weight,
                    loss_type):
    """Pure-JAX reference mirroring the PyTorch project_pose + l1/l2 loss."""
    B, K, _ = pred.shape
    V = cameras['R'].shape[0]
    N = B * K

    def project(x, v):                     # x: (N, 3)
        R = cameras['R'][v]
        T = cameras['T'][v].reshape(3, 1)
        f = cameras['f'][v].reshape(2, 1)
        c = cameras['c'][v].reshape(2, 1)
        k = cameras['k'][v].reshape(3, 1)
        p = cameras['p'][v].reshape(2, 1)
        xcam = R @ (x.T - T)               # (3, N)
        y = xcam[:2] / (xcam[2:3] + 1e-5)  # (2, N)
        r2 = jnp.sum(y * y, axis=0, keepdims=True)
        radial = 1.0 + k[0] * r2 + k[1] * r2 ** 2 + k[2] * r2 ** 3
        tan = p[0] * y[1:2] + p[1] * y[0:1]
        corr = radial + 2.0 * tan
        y = y * corr + jnp.concatenate([p[1:2], p[0:1]], axis=0) * r2
        ypix = f * y + c                   # (2, N)
        return ypix.T                      # (N, 2)

    x_flat = pred.reshape(N, 3)
    g_flat = target.reshape(N, 3)
    proj_p = jnp.concatenate([project(x_flat, v) for v in range(V)], 0)
    proj_g = jnp.concatenate([project(g_flat, v) for v in range(V)], 0)
    proj_p = proj_p.reshape(-1, K, 2)
    proj_g = proj_g.reshape(-1, K, 2)
    if use_target_weight:
        w2d = target_weight.reshape(V * B, K, 1)
        proj_p = proj_p * w2d
        proj_g = proj_g * w2d
    diff = proj_p - proj_g
    if loss_type == 'l1':
        return jnp.abs(diff)
    return diff * diff


if __name__ == "__main__":
    key = jax.random.PRNGKey(0)
    k1, k2, k3 = jax.random.split(key, 3)

    B, K, V = 2, 16, 4                      # batch, keypoints, camera views

    pred = (jax.random.normal(k1, (B, K, 3), jnp.float32) * 0.5)
    target = pred + 0.1 * jax.random.normal(k2, (B, K, 3), jnp.float32)
    target_weight = jax.random.uniform(k3, (V, B, K, 1), jnp.float32)

    # Deterministic synthetic cameras (rotation about y; translation keeps
    # the scene ~4 units in front of every camera so depth stays positive).
    angles = np.array([0.0, 0.1, 0.2, 0.3], np.float32)
    Rs, Ts, fs, cs, ks, ps = [], [], [], [], [], []
    for i, a in enumerate(angles):
        ca, sa = np.cos(a), np.sin(a)
        Rs.append(np.array([[ca, 0.0, sa],
                            [0.0, 1.0, 0.0],
                            [-sa, 0.0, ca]], np.float32))
        Ts.append(np.array([0.1 * i, -0.2 * i, -4.0 - 0.25 * i], np.float32))
        fs.append(np.array([1145.0 + i, 1143.0 + i], np.float32))
        cs.append(np.array([512.0 + i, 384.0 + i], np.float32))
        ks.append(np.array([-0.2, 0.1, 0.001], np.float32))
        ps.append(np.array([0.001, -0.0005], np.float32))
    cameras = {
        'R': jnp.asarray(np.stack(Rs)),
        'T': jnp.asarray(np.stack(Ts)),
        'f': jnp.asarray(np.stack(fs)),
        'c': jnp.asarray(np.stack(cs)),
        'k': jnp.asarray(np.stack(ks)),
        'p': jnp.asarray(np.stack(ps)),
    }

    # 1) weighted L1, reduction='none'
    loss = per_projection_loss(pred, target, cameras,
                               target_weight=target_weight,
                               use_target_weight=True,
                               loss_type='l1',
                               reduction='none')
    loss = jax.block_until_ready(loss)
    ref = _reference_loss(pred, target, cameras, target_weight,
                          use_target_weight=True, loss_type='l1')
    np.testing.assert_allclose(np.asarray(loss), np.asarray(ref),
                               rtol=1e-4, atol=2e-3)

    # 2) weighted L1, reduction='mean' (reduced directly on the kernel slab)
    loss_mean = per_projection_loss(pred, target, cameras,
                                    target_weight=target_weight,
                                    use_target_weight=True,
                                    loss_type='l1',
                                    reduction='mean')
    loss_mean = jax.block_until_ready(loss_mean)
    np.testing.assert_allclose(np.asarray(loss_mean),
                               np.asarray(jnp.mean(ref)),
                               rtol=1e-4, atol=1e-3)

    # 3) unweighted L2, reduction forced to 'none'
    loss_l2 = per_projection_loss(pred, target, cameras,
                                  target_weight=target_weight,
                                  use_target_weight=False,
                                  loss_type='l2')
    loss_l2 = jax.block_until_ready(loss_l2)
    ref_l2 = _reference_loss(pred, target, cameras, target_weight,
                             use_target_weight=False, loss_type='l2')
    np.testing.assert_allclose(np.asarray(loss_l2), np.asarray(ref_l2),
                               rtol=1e-4, atol=1e-2)

    print("KERNEL_OK")
</pallas_src>

<mosaic_0001>
module attributes {stable_mosaic.version = 11 : i64} {
  func.func @_per_proj_loss_kernel(%arg0: i32, %arg1: memref<4x21xf32, #tpu.memory_space<vmem>>, %arg2: memref<3x128xf32, #tpu.memory_space<vmem>>, %arg3: memref<3x128xf32, #tpu.memory_space<vmem>>, %arg4: memref<4x128xf32, #tpu.memory_space<vmem>>, %arg5: memref<8x128xf32, #tpu.memory_space<vmem>>) attributes {dimension_semantics = [#tpu.dimension_semantics<parallel>], iteration_bounds = array<i64: 1>, scalar_prefetch = 0 : i64, scratch_operands = 0 : i64, tpu.core_type = #tpu.core_type<tc>, window_params = [{pipeline_mode = #tpu.pipeline_mode<synchronous>, transform_indices = @transform_0, window_bounds = array<i64: 4, 21>}, {transform_indices = @transform_1, window_bounds = array<i64: 3, 128>}, {transform_indices = @transform_2, window_bounds = array<i64: 3, 128>}, {transform_indices = @transform_3, window_bounds = array<i64: 4, 128>}, {transform_indices = @transform_4, window_bounds = array<i64: 8, 128>}]} {
    %c0 = arith.constant 0 : index
    %c0_0 = arith.constant 0 : index
    %0 = vector.load %arg1[%c0, %c0_0] : memref<4x21xf32, #tpu.memory_space<vmem>>, vector<4x21xf32>
    %1 = vector.extract_strided_slice %0 {offsets = [0, 0], sizes = [4, 1], strides = [1, 1]} : vector<4x21xf32> to vector<4x1xf32>
    %2 = vector.extract_strided_slice %0 {offsets = [0, 1], sizes = [4, 1], strides = [1, 1]} : vector<4x21xf32> to vector<4x1xf32>
    %3 = vector.extract_strided_slice %0 {offsets = [0, 2], sizes = [4, 1], strides = [1, 1]} : vector<4x21xf32> to vector<4x1xf32>
    %4 = vector.extract_strided_slice %0 {offsets = [0, 3], sizes = [4, 1], strides = [1, 1]} : vector<4x21xf32> to vector<4x1xf32>
    %5 = vector.extract_strided_slice %0 {offsets = [0, 4], sizes = [4, 1], strides = [1, 1]} : vector<4x21xf32> to vector<4x1xf32>
    %6 = vector.extract_strided_slice %0 {offsets = [0, 5], sizes = [4, 1], strides = [1, 1]} : vector<4x21xf32> to vector<4x1xf32>
    %7 = vector.extract_strided_slice %0 {offsets = [0, 6], sizes = [4, 1], strides = [1, 1]} : vector<4x21xf32> to vector<4x1xf32>
    %8 = vector.extract_strided_slice %0 {offsets = [0, 7], sizes = [4, 1], strides = [1, 1]} : vector<4x21xf32> to vector<4x1xf32>
    %9 = vector.extract_strided_slice %0 {offsets = [0, 8], sizes = [4, 1], strides = [1, 1]} : vector<4x21xf32> to vector<4x1xf32>
    %10 = vector.extract_strided_slice %0 {offsets = [0, 9], sizes = [4, 1], strides = [1, 1]} : vector<4x21xf32> to vector<4x1xf32>
    %11 = vector.extract_strided_slice %0 {offsets = [0, 10], sizes = [4, 1], strides = [1, 1]} : vector<4x21xf32> to vector<4x1xf32>
    %12 = vector.extract_strided_slice %0 {offsets = [0, 11], sizes = [4, 1], strides = [1, 1]} : vector<4x21xf32> to vector<4x1xf32>
    %13 = vector.extract_strided_slice %0 {offsets = [0, 12], sizes = [4, 1], strides = [1, 1]} : vector<4x21xf32> to vector<4x1xf32>
    %14 = vector.extract_strided_slice %0 {offsets = [0, 13], sizes = [4, 1], strides = [1, 1]} : vector<4x21xf32> to vector<4x1xf32>
    %15 = vector.extract_strided_slice %0 {offsets = [0, 14], sizes = [4, 1], strides = [1, 1]} : vector<4x21xf32> to vector<4x1xf32>
    %16 = vector.extract_strided_slice %0 {offsets = [0, 15], sizes = [4, 1], strides = [1, 1]} : vector<4x21xf32> to vector<4x1xf32>
    %17 = vector.extract_strided_slice %0 {offsets = [0, 16], sizes = [4, 1], strides = [1, 1]} : vector<4x21xf32> to vector<4x1xf32>
    %18 = vector.extract_strided_slice %0 {offsets = [0, 17], sizes = [4, 1], strides = [1, 1]} : vector<4x21xf32> to vector<4x1xf32>
    %19 = vector.extract_strided_slice %0 {offsets = [0, 18], sizes = [4, 1], strides = [1, 1]} : vector<4x21xf32> to vector<4x1xf32>
    %20 = vector.extract_strided_slice %0 {offsets = [0, 19], sizes = [4, 1], strides = [1, 1]} : vector<4x21xf32> to vector<4x1xf32>
    %21 = vector.extract_strided_slice %0 {offsets = [0, 20], sizes = [4, 1], strides = [1, 1]} : vector<4x21xf32> to vector<4x1xf32>
    %c0_1 = arith.constant 0 : index
    %c0_2 = arith.constant 0 : index
    %22 = vector.load %arg2[%c0_1, %c0_2] : memref<3x128xf32, #tpu.memory_space<vmem>>, vector<3x128xf32>
    %23 = vector.extract_strided_slice %22 {offsets = [0, 0], sizes = [1, 128], strides = [1, 1]} : vector<3x128xf32> to vector<1x128xf32>
    %24 = vector.shape_cast %23 : vector<1x128xf32> to vector<1x128xf32>
    %25 = vector.broadcast %24 : vector<1x128xf32> to vector<4x128xf32>
    %26 = vector.extract_strided_slice %22 {offsets = [1, 0], sizes = [1, 128], strides = [1, 1]} : vector<3x128xf32> to vector<1x128xf32>
    %27 = vector.shape_cast %26 : vector<1x128xf32> to vector<1x128xf32>
    %28 = vector.broadcast %27 : vector<1x128xf32> to vector<4x128xf32>
    %29 = vector.extract_strided_slice %22 {offsets = [2, 0], sizes = [1, 128], strides = [1, 1]} : vector<3x128xf32> to vector<1x128xf32>
    %30 = vector.shape_cast %29 : vector<1x128xf32> to vector<1x128xf32>
    %31 = vector.broadcast %30 : vector<1x128xf32> to vector<4x128xf32>
    %32 = vector.broadcast %10 : vector<4x1xf32> to vector<4x128xf32>
    %33 = arith.subf %25, %32 : vector<4x128xf32>
    %34 = vector.broadcast %11 : vector<4x1xf32> to vector<4x128xf32>
    %35 = arith.subf %28, %34 : vector<4x128xf32>
    %36 = vector.broadcast %12 : vector<4x1xf32> to vector<4x128xf32>
    %37 = arith.subf %31, %36 : vector<4x128xf32>
    %38 = vector.broadcast %1 : vector<4x1xf32> to vector<4x128xf32>
    %39 = arith.mulf %38, %33 : vector<4x128xf32>
    %40 = vector.broadcast %2 : vector<4x1xf32> to vector<4x128xf32>
    %41 = arith.mulf %40, %35 : vector<4x128xf32>
    %42 = arith.addf %39, %41 : vector<4x128xf32>
    %43 = vector.broadcast %3 : vector<4x1xf32> to vector<4x128xf32>
    %44 = arith.mulf %43, %37 : vector<4x128xf32>
    %45 = arith.addf %42, %44 : vector<4x128xf32>
    %46 = vector.broadcast %4 : vector<4x1xf32> to vector<4x128xf32>
    %47 = arith.mulf %46, %33 : vector<4x128xf32>
    %48 = vector.broadcast %5 : vector<4x1xf32> to vector<4x128xf32>
    %49 = arith.mulf %48, %35 : vector<4x128xf32>
    %50 = arith.addf %47, %49 : vector<4x128xf32>
    %51 = vector.broadcast %6 : vector<4x1xf32> to vector<4x128xf32>
    %52 = arith.mulf %51, %37 : vector<4x128xf32>
    %53 = arith.addf %50, %52 : vector<4x128xf32>
    %54 = vector.broadcast %7 : vector<4x1xf32> to vector<4x128xf32>
    %55 = arith.mulf %54, %33 : vector<4x128xf32>
    %56 = vector.broadcast %8 : vector<4x1xf32> to vector<4x128xf32>
    %57 = arith.mulf %56, %35 : vector<4x128xf32>
    %58 = arith.addf %55, %57 : vector<4x128xf32>
    %59 = vector.broadcast %9 : vector<4x1xf32> to vector<4x128xf32>
    %60 = arith.mulf %59, %37 : vector<4x128xf32>
    %61 = arith.addf %58, %60 : vector<4x128xf32>
    %cst = arith.constant 9.99999974E-6 : f32
    %62 = vector.broadcast %cst : f32 to vector<4x128xf32>
    %63 = arith.addf %61, %62 : vector<4x128xf32>
    %64 = tpu.reciprocal %63 : vector<4x128xf32> -> vector<4x128xf32>
    %65 = arith.mulf %45, %64 : vector<4x128xf32>
    %66 = arith.mulf %53, %64 : vector<4x128xf32>
    %67 = arith.mulf %65, %65 : vector<4x128xf32>
    %68 = arith.mulf %66, %66 : vector<4x128xf32>
    %69 = arith.addf %67, %68 : vector<4x128xf32>
    %70 = vector.broadcast %19 : vector<4x1xf32> to vector<4x128xf32>
    %71 = arith.mulf %69, %70 : vector<4x128xf32>
    %72 = vector.broadcast %18 : vector<4x1xf32> to vector<4x128xf32>
    %73 = arith.addf %72, %71 : vector<4x128xf32>
    %74 = arith.mulf %69, %73 : vector<4x128xf32>
    %75 = vector.broadcast %17 : vector<4x1xf32> to vector<4x128xf32>
    %76 = arith.addf %75, %74 : vector<4x128xf32>
    %77 = arith.mulf %69, %76 : vector<4x128xf32>
    %cst_3 = arith.constant 1.000000e+00 : f32
    %78 = vector.broadcast %cst_3 : f32 to vector<4x128xf32>
    %79 = arith.addf %78, %77 : vector<4x128xf32>
    %80 = vector.broadcast %20 : vector<4x1xf32> to vector<4x128xf32>
    %81 = arith.mulf %80, %66 : vector<4x128xf32>
    %82 = vector.broadcast %21 : vector<4x1xf32> to vector<4x128xf32>
    %83 = arith.mulf %82, %65 : vector<4x128xf32>
    %84 = arith.addf %81, %83 : vector<4x128xf32>
    %cst_4 = arith.constant 2.000000e+00 : f32
    %85 = vector.broadcast %cst_4 : f32 to vector<4x128xf32>
    %86 = arith.mulf %85, %84 : vector<4x128xf32>
    %87 = arith.addf %79, %86 : vector<4x128xf32>
    %88 = arith.mulf %65, %87 : vector<4x128xf32>
    %89 = vector.broadcast %21 : vector<4x1xf32> to vector<4x128xf32>
    %90 = arith.mulf %89, %69 : vector<4x128xf32>
    %91 = arith.addf %88, %90 : vector<4x128xf32>
    %92 = vector.broadcast %13 : vector<4x1xf32> to vector<4x128xf32>
    %93 = arith.mulf %92, %91 : vector<4x128xf32>
    %94 = vector.broadcast %15 : vector<4x1xf32> to vector<4x128xf32>
    %95 = arith.addf %93, %94 : vector<4x128xf32>
    %96 = arith.mulf %66, %87 : vector<4x128xf32>
    %97 = vector.broadcast %20 : vector<4x1xf32> to vector<4x128xf32>
    %98 = arith.mulf %97, %69 : vector<4x128xf32>
    %99 = arith.addf %96, %98 : vector<4x128xf32>
    %100 = vector.broadcast %14 : vector<4x1xf32> to vector<4x128xf32>
    %101 = arith.mulf %100, %99 : vector<4x128xf32>
    %102 = vector.broadcast %16 : vector<4x1xf32> to vector<4x128xf32>
    %103 = arith.addf %101, %102 : vector<4x128xf32>
    %c0_5 = arith.constant 0 : index
    %c0_6 = arith.constant 0 : index
    %104 = vector.load %arg3[%c0_5, %c0_6] : memref<3x128xf32, #tpu.memory_space<vmem>>, vector<3x128xf32>
    %105 = vector.extract_strided_slice %104 {offsets = [0, 0], sizes = [1, 128], strides = [1, 1]} : vector<3x128xf32> to vector<1x128xf32>
    %106 = vector.shape_cast %105 : vector<1x128xf32> to vector<1x128xf32>
    %107 = vector.broadcast %106 : vector<1x128xf32> to vector<4x128xf32>
    %108 = vector.extract_strided_slice %104 {offsets = [1, 0], sizes = [1, 128], strides = [1, 1]} : vector<3x128xf32> to vector<1x128xf32>
    %109 = vector.shape_cast %108 : vector<1x128xf32> to vector<1x128xf32>
    %110 = vector.broadcast %109 : vector<1x128xf32> to vector<4x128xf32>
    %111 = vector.extract_strided_slice %104 {offsets = [2, 0], sizes = [1, 128], strides = [1, 1]} : vector<3x128xf32> to vector<1x128xf32>
    %112 = vector.shape_cast %111 : vector<1x128xf32> to vector<1x128xf32>
    %113 = vector.broadcast %112 : vector<1x128xf32> to vector<4x128xf32>
    %114 = vector.broadcast %10 : vector<4x1xf32> to vector<4x128xf32>
    %115 = arith.subf %107, %114 : vector<4x128xf32>
    %116 = vector.broadcast %11 : vector<4x1xf32> to vector<4x128xf32>
    %117 = arith.subf %110, %116 : vector<4x128xf32>
    %118 = vector.broadcast %12 : vector<4x1xf32> to vector<4x128xf32>
    %119 = arith.subf %113, %118 : vector<4x128xf32>
    %120 = vector.broadcast %1 : vector<4x1xf32> to vector<4x128xf32>
    %121 = arith.mulf %120, %115 : vector<4x128xf32>
    %122 = vector.broadcast %2 : vector<4x1xf32> to vector<4x128xf32>
    %123 = arith.mulf %122, %117 : vector<4x128xf32>
    %124 = arith.addf %121, %123 : vector<4x128xf32>
    %125 = vector.broadcast %3 : vector<4x1xf32> to vector<4x128xf32>
    %126 = arith.mulf %125, %119 : vector<4x128xf32>
    %127 = arith.addf %124, %126 : vector<4x128xf32>
    %128 = vector.broadcast %4 : vector<4x1xf32> to vector<4x128xf32>
    %129 = arith.mulf %128, %115 : vector<4x128xf32>
    %130 = vector.broadcast %5 : vector<4x1xf32> to vector<4x128xf32>
    %131 = arith.mulf %130, %117 : vector<4x128xf32>
    %132 = arith.addf %129, %131 : vector<4x128xf32>
    %133 = vector.broadcast %6 : vector<4x1xf32> to vector<4x128xf32>
    %134 = arith.mulf %133, %119 : vector<4x128xf32>
    %135 = arith.addf %132, %134 : vector<4x128xf32>
    %136 = vector.broadcast %7 : vector<4x1xf32> to vector<4x128xf32>
    %137 = arith.mulf %136, %115 : vector<4x128xf32>
    %138 = vector.broadcast %8 : vector<4x1xf32> to vector<4x128xf32>
    %139 = arith.mulf %138, %117 : vector<4x128xf32>
    %140 = arith.addf %137, %139 : vector<4x128xf32>
    %141 = vector.broadcast %9 : vector<4x1xf32> to vector<4x128xf32>
    %142 = arith.mulf %141, %119 : vector<4x128xf32>
    %143 = arith.addf %140, %142 : vector<4x128xf32>
    %cst_7 = arith.constant 9.99999974E-6 : f32
    %144 = vector.broadcast %cst_7 : f32 to vector<4x128xf32>
    %145 = arith.addf %143, %144 : vector<4x128xf32>
    %146 = tpu.reciprocal %145 : vector<4x128xf32> -> vector<4x128xf32>
    %147 = arith.mulf %127, %146 : vector<4x128xf32>
    %148 = arith.mulf %135, %146 : vector<4x128xf32>
    %149 = arith.mulf %147, %147 : vector<4x128xf32>
    %150 = arith.mulf %148, %148 : vector<4x128xf32>
    %151 = arith.addf %149, %150 : vector<4x128xf32>
    %152 = vector.broadcast %19 : vector<4x1xf32> to vector<4x128xf32>
    %153 = arith.mulf %151, %152 : vector<4x128xf32>
    %154 = vector.broadcast %18 : vector<4x1xf32> to vector<4x128xf32>
    %155 = arith.addf %154, %153 : vector<4x128xf32>
    %156 = arith.mulf %151, %155 : vector<4x128xf32>
    %157 = vector.broadcast %17 : vector<4x1xf32> to vector<4x128xf32>
    %158 = arith.addf %157, %156 : vector<4x128xf32>
    %159 = arith.mulf %151, %158 : vector<4x128xf32>
    %cst_8 = arith.constant 1.000000e+00 : f32
    %160 = vector.broadcast %cst_8 : f32 to vector<4x128xf32>
    %161 = arith.addf %160, %159 : vector<4x128xf32>
    %162 = vector.broadcast %20 : vector<4x1xf32> to vector<4x128xf32>
    %163 = arith.mulf %162, %148 : vector<4x128xf32>
    %164 = vector.broadcast %21 : vector<4x1xf32> to vector<4x128xf32>
    %165 = arith.mulf %164, %147 : vector<4x128xf32>
    %166 = arith.addf %163, %165 : vector<4x128xf32>
    %cst_9 = arith.constant 2.000000e+00 : f32
    %167 = vector.broadcast %cst_9 : f32 to vector<4x128xf32>
    %168 = arith.mulf %167, %166 : vector<4x128xf32>
    %169 = arith.addf %161, %168 : vector<4x128xf32>
    %170 = arith.mulf %147, %169 : vector<4x128xf32>
    %171 = vector.broadcast %21 : vector<4x1xf32> to vector<4x128xf32>
    %172 = arith.mulf %171, %151 : vector<4x128xf32>
    %173 = arith.addf %170, %172 : vector<4x128xf32>
    %174 = vector.broadcast %13 : vector<4x1xf32> to vector<4x128xf32>
    %175 = arith.mulf %174, %173 : vector<4x128xf32>
    %176 = vector.broadcast %15 : vector<4x1xf32> to vector<4x128xf32>
    %177 = arith.addf %175, %176 : vector<4x128xf32>
    %178 = arith.mulf %148, %169 : vector<4x128xf32>
    %179 = vector.broadcast %20 : vector<4x1xf32> to vector<4x128xf32>
    %180 = arith.mulf %179, %151 : vector<4x128xf32>
    %181 = arith.addf %178, %180 : vector<4x128xf32>
    %182 = vector.broadcast %14 : vector<4x1xf32> to vector<4x128xf32>
    %183 = arith.mulf %182, %181 : vector<4x128xf32>
    %184 = vector.broadcast %16 : vector<4x1xf32> to vector<4x128xf32>
    %185 = arith.addf %183, %184 : vector<4x128xf32>
    %c0_10 = arith.constant 0 : index
    %c0_11 = arith.constant 0 : index
    %186 = vector.load %arg4[%c0_10, %c0_11] : memref<4x128xf32, #tpu.memory_space<vmem>>, vector<4x128xf32>
    %187 = arith.mulf %95, %186 : vector<4x128xf32>
    %188 = arith.mulf %103, %186 : vector<4x128xf32>
    %189 = arith.mulf %177, %186 : vector<4x128xf32>
    %190 = arith.mulf %185, %186 : vector<4x128xf32>
    %191 = arith.subf %187, %189 : vector<4x128xf32>
    %192 = arith.subf %188, %190 : vector<4x128xf32>
    %193 = math.absf %191 : vector<4x128xf32>
    %194 = math.absf %192 : vector<4x128xf32>
    %c0_12 = arith.constant 0 : index
    %c0_13 = arith.constant 0 : index
    %195 = vector.load %arg5[%c0_12, %c0_13] : memref<8x128xf32, #tpu.memory_space<vmem>>, vector<4x128xf32>
    tpu.vector_store %arg5[%c0_12, %c0_13], %193 {strides = array<i32>} : memref<8x128xf32, #tpu.memory_space<vmem>>, vector<4x128xf32>,
    %c4 = arith.constant 4 : index
    %c0_14 = arith.constant 0 : index
    %196 = vector.load %arg5[%c4, %c0_14] : memref<8x128xf32, #tpu.memory_space<vmem>>, vector<4x128xf32>
    tpu.vector_store %arg5[%c4, %c0_14], %194 {strides = array<i32>} : memref<8x128xf32, #tpu.memory_space<vmem>>, vector<4x128xf32>,
    return
  }
  func.func @transform_0(%arg0: i32) -> (i32, i32) {
    %c0_i32 = arith.constant 0 : i32
    %c0_i32_0 = arith.constant 0 : i32
    %c0_i32_1 = arith.constant 0 : i32
    return %c0_i32, %c0_i32_0 : i32, i32
  }
  func.func @transform_1(%arg0: i32) -> (i32, i32) {
    %c0_i32 = arith.constant 0 : i32
    %c0_i32_0 = arith.constant 0 : i32
    return %c0_i32, %arg0 : i32, i32
  }
  func.func @transform_2(%arg0: i32) -> (i32, i32) {
    %c0_i32 = arith.constant 0 : i32
    %c0_i32_0 = arith.constant 0 : i32
    return %c0_i32, %arg0 : i32, i32
  }
  func.func @transform_3(%arg0: i32) -> (i32, i32) {
    %c0_i32 = arith.constant 0 : i32
    %c0_i32_0 = arith.constant 0 : i32
    return %c0_i32, %arg0 : i32, i32
  }
  func.func @transform_4(%arg0: i32) -> (i32, i32) {
    %c0_i32 = arith.constant 0 : i32
    %c0_i32_0 = arith.constant 0 : i32
    return %c0_i32, %arg0 : i32, i32
  }
}

</mosaic_0001>

<llo_original>
// kernel: tpu_custom_call.1
$region0: #{tpu_custom_call.1}
  #allocation0 [shape = 'u32[]', space=smem, size = 0x4, offset = 0x4, fixed_abs, tag = 'smem constant byte address 0x4 - core index']
  #allocation1 [shape = 'u32[144,128]{1,0:T(1,128)}', space=vmem, size = 0x12000, scoped, tag = 'internal scratch']
  %s0 = inlined_call_operand.hbm [shape: f32[4,21], index: 0, kind: input, shape index: {}]
  %s1 = inlined_call_operand.hbm [shape: f32[3,128], index: 1, kind: input, shape index: {}]
  %s2 = inlined_call_operand.vmem [shape: f32[3,128], index: 2, kind: input, shape index: {}]
  %s3 = inlined_call_operand.vmem [shape: f32[4,128], index: 3, kind: input, shape index: {}]
  %s4 = inlined_call_operand.hbm [shape: f32[8,128], index: 4, kind: output, shape index: {}]
  %s5 = sld [smem:[#allocation0]]
  $region34: #{tpu_custom_call.1} parent=0
    _
  %s7 = ssub.s32 1, %s5
  %s8 = scalar_select 0, %s7, %s5
  $region1: #{tpu_custom_call.1} parent=0
    #allocation2 [shape = 'u8[2048]{0}', space=vmem, size = 0x800, scoped, tag = 'input window, operand 0, single buffered']
    #allocation3 [shape = 's32[1]{0}', space=sflag, size = 0x4, scoped, tag = 'scoped memory for tpu_custom_call.1']
    #allocation4 [shape = 's32[1]{0}', space=sflag, size = 0x4, scoped, tag = 'scoped memory for tpu_custom_call.1']
    #allocation5 [shape = 'u8[2048]{0}', space=vmem, size = 0x800, scoped, tag = 'input window, operand 1, single buffered']
    #allocation6 [shape = 's32[1]{0}', space=sflag, size = 0x4, scoped, tag = 'scoped memory for tpu_custom_call.1']
    #allocation7 [shape = 'u8[4096]{0}', space=vmem, size = 0x1000, scoped, tag = 'output window, operand 0, single buffered']
    %9 = vsyncpa [#allocation3], 0
    %10 = vsyncpa [#allocation6], 0
    %11 = vsyncpa [#allocation4], 0
    // Predicated region
    $region2: #{tpu_custom_call.1} parent=1 // pred_check
      _
    $region3: #{tpu_custom_call.1} parent=1 // pred_check_branch
      %13 = sbr.rel (0) target = $region5
    $region4: #{tpu_custom_call.1} parent=1 // pred_region
      %s15 = ssub.s32 64, 64
      %16 = vsyncadd [#allocation3], %s15
      %s18 = sshll.u32 [#allocation2], 4
      %s19 = int_to_ptr.vmem [resolvable:$true] %s18
      %21 = dma.hbm_to_vmem [thread:$0]  %s0, 64, %s19, [#allocation3]
    $region5: #{tpu_custom_call.1} parent=1 // pred_fallthru
      _
    // Predicated region
    $region6: #{tpu_custom_call.1} parent=1 // pred_check
      _
    $region7: #{tpu_custom_call.1} parent=1 // pred_check_branch
      %23 = sbr.rel (0) target = $region9
    $region8: #{tpu_custom_call.1} parent=1 // pred_region
      %s25 = ssub.s32 64, 64
      %26 = vsyncadd [#allocation6], %s25
      %s28 = sshll.u32 [#allocation5], 4
      %s29 = int_to_ptr.vmem [resolvable:$true] %s28
      %31 = dma.hbm_to_vmem [thread:$0]  %s1, 64, %s29, [#allocation6]
    $region9: #{tpu_custom_call.1} parent=1 // pred_fallthru
      _
    // Predicated region
    $region10: #{tpu_custom_call.1} parent=1 // pred_check
      _
    $region11: #{tpu_custom_call.1} parent=1 // pred_check_branch
      %33 = sbr.rel (0) target = $region13
    $region12: #{tpu_custom_call.1} parent=1 // pred_region
      _
    $region13: #{tpu_custom_call.1} parent=1 // pred_fallthru
      _
    // Predicated region
    $region14: #{tpu_custom_call.1} parent=1 // pred_check
      _
    $region15: #{tpu_custom_call.1} parent=1 // pred_check_branch
      %35 = sbr.rel (0) target = $region17
    $region16: #{tpu_custom_call.1} parent=1 // pred_region
      _
    $region17: #{tpu_custom_call.1} parent=1 // pred_fallthru
      _
    // Predicated region
    $region18: #{tpu_custom_call.1} parent=1 // pred_check
      _
    $region19: #{tpu_custom_call.1} parent=1 // pred_check_branch
      %37 = sbr.rel (0) target = $region21
    $region20: #{tpu_custom_call.1} parent=1 // pred_region
      %38 = dma.done [#allocation3], 64
    $region21: #{tpu_custom_call.1} parent=1 // pred_fallthru
      _
    // Predicated region
    $region22: #{tpu_custom_call.1} parent=1 // pred_check
      _
    $region23: #{tpu_custom_call.1} parent=1 // pred_check_branch
      %40 = sbr.rel (0) target = $region25
    $region24: #{tpu_custom_call.1} parent=1 // pred_region
      %41 = dma.done [#allocation6], 64
    $region25: #{tpu_custom_call.1} parent=1 // pred_fallthru
      _
    %v42 = vld [vmem:[#allocation2] sm:$0xf]
    %v43 = vld [vmem:[#allocation5] sm:$0x7]
    %v44 = vlaneseq
    %v45 = vshrl.u32 %v44, 7
    %v46 = vsub.s32 0, %v45
    %v47 = vrot.slane %v43, %v46
    %v48 = vlaneseq
    %v49 = vshrl.u32 %v48, 7
    %v50 = vsub.s32 1, %v49
    %v51 = vrot.slane %v43, %v50
    %v52 = vlaneseq
    %v53 = vshrl.u32 %v52, 7
    %v54 = vsub.s32 2, %v53
    %v55 = vrot.slane %v43, %v54
    %57 = vset.pattern.permute.xlu0 9
    %58 = vperm.xlu0 %57, %v42
    %v59 = vpop.permute.xlu0 %58
    %v61 = vsub.f32 %v47, %v59
    %62 = vset.pattern.permute.xlu0 10
    %63 = vperm.xlu0 %62, %v42
    %v64 = vpop.permute.xlu0 %63
    %v66 = vsub.f32 %v51, %v64
    %67 = vset.pattern.permute.xlu0 11
    %68 = vperm.xlu0 %67, %v42
    %v69 = vpop.permute.xlu0 %68
    %v71 = vsub.f32 %v55, %v69
    %72 = vset.pattern.permute.xlu0 0
    %73 = vperm.xlu0 %72, %v42
    %v74 = vpop.permute.xlu0 %73
    %v76 = vmul.f32 %v74, %v61
    %77 = vset.pattern.permute.xlu0 1
    %78 = vperm.xlu0 %77, %v42
    %v79 = vpop.permute.xlu0 %78
    %v81 = vmul.f32 %v79, %v66
    %v82 = vadd.f32 %v76, %v81
    %83 = vset.pattern.permute.xlu0 2
    %84 = vperm.xlu0 %83, %v42
    %v85 = vpop.permute.xlu0 %84
    %v87 = vmul.f32 %v85, %v71
    %v88 = vadd.f32 %v82, %v87
    %89 = vset.pattern.permute.xlu0 3
    %90 = vperm.xlu0 %89, %v42
    %v91 = vpop.permute.xlu0 %90
    %v93 = vmul.f32 %v91, %v61
    %94 = vset.pattern.permute.xlu0 4
    %95 = vperm.xlu0 %94, %v42
    %v96 = vpop.permute.xlu0 %95
    %v98 = vmul.f32 %v96, %v66
    %v99 = vadd.f32 %v93, %v98
    %100 = vset.pattern.permute.xlu0 5
    %101 = vperm.xlu0 %100, %v42
    %v102 = vpop.permute.xlu0 %101
    %v104 = vmul.f32 %v102, %v71
    %v105 = vadd.f32 %v99, %v104
    %106 = vset.pattern.permute.xlu0 6
    %107 = vperm.xlu0 %106, %v42
    %v108 = vpop.permute.xlu0 %107
    %v110 = vmul.f32 %v108, %v61
    %111 = vset.pattern.permute.xlu0 7
    %112 = vperm.xlu0 %111, %v42
    %v113 = vpop.permute.xlu0 %112
    %v115 = vmul.f32 %v113, %v66
    %v116 = vadd.f32 %v110, %v115
    %117 = vset.pattern.permute.xlu0 8
    %118 = vperm.xlu0 %117, %v42
    %v119 = vpop.permute.xlu0 %118
    %v121 = vmul.f32 %v119, %v71
    %v122 = vadd.f32 %v116, %v121
    %v123 = vadd.f32 %v122, 1e-05
    %v124 = vrcp.pop %v123
    %v125 = vmul.f32 %v88, %v124
    %v126 = vmul.f32 %v105, %v124
    %v127 = vmul.f32 %v125, %v125
    %v128 = vmul.f32 %v126, %v126
    %v129 = vadd.f32 %v127, %v128
    %130 = vset.pattern.permute.xlu0 18
    %131 = vperm.xlu0 %130, %v42
    %v132 = vpop.permute.xlu0 %131
    %v134 = vmul.f32 %v129, %v132
    %135 = vset.pattern.permute.xlu0 17
    %136 = vperm.xlu0 %135, %v42
    %v137 = vpop.permute.xlu0 %136
    %v139 = vadd.f32 %v137, %v134
    %v140 = vmul.f32 %v129, %v139
    %141 = vset.pattern.permute.xlu0 16
    %142 = vperm.xlu0 %141, %v42
    %v143 = vpop.permute.xlu0 %142
    %v145 = vadd.f32 %v143, %v140
    %v146 = vmul.f32 %v129, %v145
    %v147 = vadd.f32 %v146, 1.0
    %148 = vset.pattern.permute.xlu0 19
    %149 = vperm.xlu0 %148, %v42
    %v150 = vpop.permute.xlu0 %149
    %v152 = vmul.f32 %v150, %v126
    %153 = vset.pattern.permute.xlu0 20
    %154 = vperm.xlu0 %153, %v42
    %v155 = vpop.permute.xlu0 %154
    %v157 = vmul.f32 %v155, %v125
    %v158 = vadd.f32 %v152, %v157
    %v159 = vmul.f32 %v158, 2.0
    %v160 = vadd.f32 %v147, %v159
    %v161 = vmul.f32 %v125, %v160
    %v162 = vmul.f32 %v155, %v129
    %v163 = vadd.f32 %v161, %v162
    %164 = vset.pattern.permute.xlu0 12
    %165 = vperm.xlu0 %164, %v42
    %v166 = vpop.permute.xlu0 %165
    %v168 = vmul.f32 %v166, %v163
    %169 = vset.pattern.permute.xlu0 14
    %170 = vperm.xlu0 %169, %v42
    %v171 = vpop.permute.xlu0 %170
    %v173 = vadd.f32 %v168, %v171
    %v174 = vmul.f32 %v126, %v160
    %v175 = vmul.f32 %v150, %v129
    %v176 = vadd.f32 %v174, %v175
    %177 = vset.pattern.permute.xlu0 13
    %178 = vperm.xlu0 %177, %v42
    %v179 = vpop.permute.xlu0 %178
    %v181 = vmul.f32 %v179, %v176
    %182 = vset.pattern.permute.xlu0 15
    %183 = vperm.xlu0 %182, %v42
    %v184 = vpop.permute.xlu0 %183
    %v186 = vadd.f32 %v181, %v184
    %v187 = vld [vmem:[%s2] sm:$0x7]
    %v188 = vlaneseq
    %v189 = vshrl.u32 %v188, 7
    %v190 = vsub.s32 0, %v189
    %v191 = vrot.slane %v187, %v190
    %v192 = vlaneseq
    %v193 = vshrl.u32 %v192, 7
    %v194 = vsub.s32 1, %v193
    %v195 = vrot.slane %v187, %v194
    %v196 = vlaneseq
    %v197 = vshrl.u32 %v196, 7
    %v198 = vsub.s32 2, %v197
    %v199 = vrot.slane %v187, %v198
    %v200 = vsub.f32 %v191, %v59
    %v201 = vsub.f32 %v195, %v64
    %v202 = vsub.f32 %v199, %v69
    %v203 = vmul.f32 %v74, %v200
    %v204 = vmul.f32 %v79, %v201
    %v205 = vadd.f32 %v203, %v204
    %v206 = vmul.f32 %v85, %v202
    %v207 = vadd.f32 %v205, %v206
    %v208 = vmul.f32 %v91, %v200
    %v209 = vmul.f32 %v96, %v201
    %v210 = vadd.f32 %v208, %v209
    %v211 = vmul.f32 %v102, %v202
    %v212 = vadd.f32 %v210, %v211
    %v213 = vmul.f32 %v108, %v200
    %v214 = vmul.f32 %v113, %v201
    %v215 = vadd.f32 %v213, %v214
    %v216 = vmul.f32 %v119, %v202
    %v217 = vadd.f32 %v215, %v216
    %v218 = vadd.f32 %v217, 1e-05
    %v219 = vrcp.pop %v218
    %v220 = vmul.f32 %v207, %v219
    %v221 = vmul.f32 %v212, %v219
    %v222 = vmul.f32 %v220, %v220
    %v223 = vmul.f32 %v221, %v221
    %v224 = vadd.f32 %v222, %v223
    %v225 = vmul.f32 %v224, %v132
    %v226 = vadd.f32 %v137, %v225
    %v227 = vmul.f32 %v224, %v226
    %v228 = vadd.f32 %v143, %v227
    %v229 = vmul.f32 %v224, %v228
    %v230 = vadd.f32 %v229, 1.0
    %v231 = vmul.f32 %v150, %v221
    %v232 = vmul.f32 %v155, %v220
    %v233 = vadd.f32 %v231, %v232
    %v234 = vmul.f32 %v233, 2.0
    %v235 = vadd.f32 %v230, %v234
    %v236 = vmul.f32 %v220, %v235
    %v237 = vmul.f32 %v155, %v224
    %v238 = vadd.f32 %v236, %v237
    %v239 = vmul.f32 %v166, %v238
    %v240 = vadd.f32 %v239, %v171
    %v241 = vmul.f32 %v221, %v235
    %v242 = vmul.f32 %v150, %v224
    %v243 = vadd.f32 %v241, %v242
    %v244 = vmul.f32 %v179, %v243
    %v245 = vadd.f32 %v244, %v184
    %v246 = vld [vmem:[%s3] sm:$0xf]
    %v247 = vmul.f32 %v173, %v246
    %v248 = vmul.f32 %v186, %v246
    %v249 = vmul.f32 %v240, %v246
    %v250 = vmul.f32 %v245, %v246
    %v251 = vsub.f32 %v247, %v249
    %v252 = vsub.f32 %v248, %v250
    %v253 = vand.u32 2147483647, %v251
    %v254 = vand.u32 2147483647, %v252
    %255 = vst [vmem:[#allocation7] sm:$0xf] %v253
    %256 = vst [vmem:[#allocation7 + $0x4] sm:$0xf] %v254
    // Predicated region
    $region26: #{tpu_custom_call.1} parent=1 // pred_check
      _
    $region27: #{tpu_custom_call.1} parent=1 // pred_check_branch
      %258 = sbr.rel (0) target = $region29
    $region28: #{tpu_custom_call.1} parent=1 // pred_region
      %s260 = ssub.s32 128, 128
      %261 = vsyncadd [#allocation4], %s260
      %s263 = sshll.u32 [#allocation7], 4
      %s264 = int_to_ptr.vmem [resolvable:$true] %s263
      %266 = dma.vmem_to_hbm [thread:$0]  %s264, 128, %s4, [#allocation4]
    $region29: #{tpu_custom_call.1} parent=1 // pred_fallthru
      _
    // Predicated region
    $region30: #{tpu_custom_call.1} parent=1 // pred_check
      _
    $region31: #{tpu_custom_call.1} parent=1 // pred_check_branch
      %268 = sbr.rel (0) target = $region33
    $region32: #{tpu_custom_call.1} parent=1 // pred_region
      %269 = dma.done [#allocation4], 128
    $region33: #{tpu_custom_call.1} parent=1 // pred_fallthru
      _
    %270 = vsyncpa [#allocation3], 1
    %271 = vsyncpa [#allocation6], 1
    %272 = vsyncpa [#allocation4], 1

</llo_original>
